<compile_context>
chip_gen: v5e
topology: v5e:2x2
jax: 0.10.0
libtpu: 0.0.40
codegen_flags: <defaults>
</compile_context>

<pallas_src>
import math
from functools import partial

import jax
import jax.numpy as jnp
from jax import lax
from jax.experimental import pallas as pl
from jax.experimental.pallas import tpu as pltpu


# ----------------------------- fused Pallas kernel ----------------------------

def _fused_self_attention_kernel(x_ref, wqkv_ref, bqkv_ref, wproj_ref, bproj_ref,
                                 o_ref, *, n_heads: int):
    Bb, S, D = x_ref.shape
    hd = D // n_heads
    dt = wqkv_ref.dtype                 # MXU-input dtype (bf16 fast path or f32)

    # ---- QKV projection over ALL rows in the block (bias fused, Q pre-scaled in weights)
    x2 = x_ref[...].reshape(Bb * S, D)
    qkv = (jnp.dot(x2, wqkv_ref[...], preferred_element_type=jnp.float32)
           + bqkv_ref[...])                                            # (Bb*S, 3D) f32

    q = qkv[:, 0 * D:1 * D].reshape(Bb, S, D).astype(dt)
    k = qkv[:, 1 * D:2 * D].reshape(Bb, S, D).astype(dt)
    v = qkv[:, 2 * D:3 * D].reshape(Bb, S, D).astype(dt)

    # ---- per-head attention, batched over the batch dim (transpose-free QK^T)
    head_outs = []
    for h in range(n_heads):                                           # static unroll
        lo = h * hd
        qh = q[:, :, lo:lo + hd]                                       # (Bb, S, hd)
        kh = k[:, :, lo:lo + hd]
        vh = v[:, :, lo:lo + hd]

        s = jnp.einsum("bqd,bkd->bqk", qh, kh,
                       preferred_element_type=jnp.float32)             # (Bb, S, S)
        s = s - jnp.max(s, axis=-1, keepdims=True)
        p = jnp.exp(s)
        p = p * pl.reciprocal(jnp.sum(p, axis=-1, keepdims=True),
                              approx=True)                             # EUP slot
        head_outs.append(jnp.einsum("bqk,bkd->bqd", p.astype(dt), vh,
                                    preferred_element_type=jnp.float32))

    y = jnp.concatenate(head_outs, axis=-1).reshape(Bb * S, D).astype(dt)

    # ---- output projection over ALL rows in the block
    out = (jnp.dot(y, wproj_ref[...], preferred_element_type=jnp.float32)
           + bproj_ref[...])                                           # (Bb*S, D) f32
    o_ref[...] = out.reshape(Bb, S, D).astype(o_ref.dtype)


# ------------------------------ wrapper ---------------------------------------

def _num_tensorcores() -> int:
    """TensorCores per device: 1 on v5e/v6e, 2 on v7x.  Safe fallback to 1."""
    try:
        return max(1, int(getattr(jax.devices()[0], "num_cores", 1)))
    except Exception:
        return 1


@partial(jax.jit, static_argnames=("n_heads", "num_blocks"))
def _self_attention_forward(x, kparams, n_heads, num_blocks):
    b, s, d = x.shape
    assert d % n_heads == 0, "dim must be divisible by n_heads"
    assert b % num_blocks == 0, "batch must be divisible by num_blocks"
    bb = b // num_blocks

    wqkv = kparams["w_qkv_t"]        # (d, 3d), Q columns pre-scaled, possibly bf16
    bqkv = kparams["b_qkv_row"]      # (1, 3d) f32, Q columns pre-scaled
    wproj = kparams["w_proj_t"]      # (d, d)
    bproj = kparams["b_proj_row"]    # (1, d) f32

    x_in = x.astype(wqkv.dtype)      # cast once; accumulation stays f32 in-kernel

    in_isz = jnp.dtype(wqkv.dtype).itemsize
    cost = pl.CostEstimate(
        flops=(2 * b * s * d * 3 * d          # QKV projection
               + 4 * b * s * s * d            # QK^T + P@V over all heads
               + 2 * b * s * d * d),          # output projection
        transcendentals=b * n_heads * s * s,  # exp in the softmax
        bytes_accessed=(x_in.size * in_isz + wqkv.size * in_isz + wproj.size * in_isz
                        + bqkv.size * 4 + bproj.size * 4
                        + b * s * d * jnp.dtype(x.dtype).itemsize),
    )

    kernel = partial(_fused_self_attention_kernel, n_heads=n_heads)
    return pl.pallas_call(
        kernel,
        out_shape=jax.ShapeDtypeStruct((b, s, d), x.dtype),
        grid_spec=pltpu.PrefetchScalarGridSpec(
            num_scalar_prefetch=0,
            grid=(num_blocks,),                                   # 1 step/TC, not 1 step/batch
            in_specs=[
                pl.BlockSpec((bb, s, d), lambda i: (i, 0, 0)),    # x: batch block / step
                pl.BlockSpec((d, 3 * d), lambda i: (0, 0)),       # w_qkv (resident)
                pl.BlockSpec((1, 3 * d), lambda i: (0, 0)),       # b_qkv
                pl.BlockSpec((d, d), lambda i: (0, 0)),           # w_proj (resident)
                pl.BlockSpec((1, d), lambda i: (0, 0)),           # b_proj
            ],
            out_specs=pl.BlockSpec((bb, s, d), lambda i: (i, 0, 0)),
        ),
        compiler_params=pltpu.CompilerParams(
            dimension_semantics=("parallel",)),                   # shards steps over TCs on v7x
        cost_estimate=cost,
    )(x_in, wqkv, bqkv, wproj, bproj)


def self_attention_forward(x, kparams, n_heads, num_blocks=None):
    if num_blocks is None:
        num_blocks = math.gcd(int(x.shape[0]), _num_tensorcores()) or 1
    return _self_attention_forward(x, kparams, n_heads, int(num_blocks))


def make_kernel_params(params, dim, n_heads, compute_dtype=jnp.bfloat16):
    """One-time param transform: PyTorch (out,in) -> (in,out), fold the 1/sqrt(hd)
    Q-scale into the Q columns of w_qkv/b_qkv, cast matmul weights to compute_dtype."""
    hd = dim // n_heads
    scale = 1.0 / math.sqrt(hd)
    col_scale = jnp.concatenate(
        [jnp.full((dim,), scale, jnp.float32), jnp.ones((2 * dim,), jnp.float32)])

    w_qkv_t = jnp.asarray(params["w_qkv"], jnp.float32).T * col_scale[None, :]
    b_qkv = jnp.asarray(params["b_qkv"], jnp.float32).reshape(1, 3 * dim) * col_scale[None, :]
    return {
        "w_qkv_t": w_qkv_t.astype(compute_dtype),                          # (dim, 3*dim)
        "b_qkv_row": b_qkv,                                                # f32 (add is f32)
        "w_proj_t": jnp.asarray(params["w_proj"], jnp.float32).T.astype(compute_dtype),
        "b_proj_row": jnp.asarray(params["b_proj"], jnp.float32).reshape(1, dim),
    }


# ------------------------------ reference -------------------------------------

def self_attention_ref(x, params, n_heads):
    b, s, d = x.shape
    hd = d // n_heads
    qkv = x @ params["w_qkv"].T + params["b_qkv"]
    q, k, v = jnp.split(qkv, 3, axis=-1)
    q = q.reshape(b, s, n_heads, hd).transpose(0, 2, 1, 3)
    k = k.reshape(b, s, n_heads, hd).transpose(0, 2, 1, 3)
    v = v.reshape(b, s, n_heads, hd).transpose(0, 2, 1, 3)
    att = jnp.einsum("bhqd,bhkd->bhqk", q, k) / math.sqrt(hd)
    att = jax.nn.softmax(att, axis=-1)
    y = jnp.einsum("bhqk,bhkd->bhqd", att, v)
    y = y.transpose(0, 2, 1, 3).reshape(b, s, d)
    return y @ params["w_proj"].T + params["b_proj"]


# -------------------------------- main -----------------------------------------

if __name__ == "__main__":
    # cfg: dim=32, n_heads=4; dropout rates irrelevant in eval mode
    b, s, dim, n_heads = 2, 8, 32, 4

    key = jax.random.PRNGKey(0)
    kx, k1, k2, k3, k4 = jax.random.split(key, 5)

    x = jax.random.normal(kx, (b, s, dim), dtype=jnp.float32)

    scale_qkv = 1.0 / math.sqrt(dim)
    params = {
        "w_qkv": jax.random.uniform(k1, (3 * dim, dim), jnp.float32,
                                    -scale_qkv, scale_qkv),   # PyTorch Linear: (out, in)
        "b_qkv": jax.random.uniform(k2, (3 * dim,), jnp.float32,
                                    -scale_qkv, scale_qkv),
        "w_proj": jax.random.uniform(k3, (dim, dim), jnp.float32,
                                     -scale_qkv, scale_qkv),
        "b_proj": jax.random.uniform(k4, (dim,), jnp.float32,
                                     -scale_qkv, scale_qkv),
    }

    y_ref = self_attention_ref(x, params, n_heads)

    # 1) f32 MXU-input path: exact-dtype parity with the PyTorch module.
    kparams_f32 = make_kernel_params(params, dim, n_heads, compute_dtype=jnp.float32)
    y_f32 = jax.block_until_ready(self_attention_forward(x, kparams_f32, n_heads))
    assert y_f32.shape == (b, s, dim)
    assert jnp.allclose(y_f32, y_ref, atol=2e-3, rtol=2e-3), "f32 path mismatch vs reference"

    # 2) bf16 MXU-input fast path (v6e/v7x): accumulation/softmax stay f32, looser tol.
    kparams_bf16 = make_kernel_params(params, dim, n_heads, compute_dtype=jnp.bfloat16)
    y_bf16 = jax.block_until_ready(self_attention_forward(x, kparams_bf16, n_heads))
    assert y_bf16.shape == (b, s, dim)
    assert jnp.allclose(y_bf16, y_ref, atol=5e-2, rtol=5e-2), "bf16 path mismatch vs reference"

    print("KERNEL_OK")
</pallas_src>

<mosaic_0001>
module attributes {stable_mosaic.version = 11 : i64} {
  func.func @_fused_self_attention_kernel(%arg0: i32, %arg1: memref<2x8x32xf32, #tpu.memory_space<vmem>>, %arg2: memref<32x96xf32, #tpu.memory_space<vmem>>, %arg3: memref<1x96xf32, #tpu.memory_space<vmem>>, %arg4: memref<32x32xf32, #tpu.memory_space<vmem>>, %arg5: memref<1x32xf32, #tpu.memory_space<vmem>>, %arg6: memref<2x8x32xf32, #tpu.memory_space<vmem>>) attributes {dimension_semantics = [#tpu.dimension_semantics<parallel>], iteration_bounds = array<i64: 1>, scalar_prefetch = 0 : i64, scratch_operands = 0 : i64, tpu.core_type = #tpu.core_type<tc>, window_params = [{transform_indices = @transform_0, window_bounds = array<i64: 2, 8, 32>}, {pipeline_mode = #tpu.pipeline_mode<synchronous>, transform_indices = @transform_1, window_bounds = array<i64: 32, 96>}, {pipeline_mode = #tpu.pipeline_mode<synchronous>, transform_indices = @transform_2, window_bounds = array<i64: 1, 96>}, {pipeline_mode = #tpu.pipeline_mode<synchronous>, transform_indices = @transform_3, window_bounds = array<i64: 32, 32>}, {pipeline_mode = #tpu.pipeline_mode<synchronous>, transform_indices = @transform_4, window_bounds = array<i64: 1, 32>}, {transform_indices = @transform_5, window_bounds = array<i64: 2, 8, 32>}]} {
    %c0 = arith.constant 0 : index
    %c0_0 = arith.constant 0 : index
    %c0_1 = arith.constant 0 : index
    %0 = vector.load %arg1[%c0, %c0_0, %c0_1] : memref<2x8x32xf32, #tpu.memory_space<vmem>>, vector<2x8x32xf32>
    %1 = vector.shape_cast %0 : vector<2x8x32xf32> to vector<16x32xf32>
    %c0_2 = arith.constant 0 : index
    %c0_3 = arith.constant 0 : index
    %2 = vector.load %arg2[%c0_2, %c0_3] : memref<32x96xf32, #tpu.memory_space<vmem>>, vector<32x96xf32>
    %cst = arith.constant dense<0.000000e+00> : vector<16x96xf32>
    %3 = tpu.matmul %1, %2, %cst {dimension_numbers = #tpu.dot_dimension_numbers<[1], [0], [0], [1], [0, 0, 1, 1], [], []>} : vector<16x32xf32>, vector<32x96xf32>, vector<16x96xf32> -> vector<16x96xf32>
    %c0_4 = arith.constant 0 : index
    %c0_5 = arith.constant 0 : index
    %4 = vector.load %arg3[%c0_4, %c0_5] : memref<1x96xf32, #tpu.memory_space<vmem>>, vector<1x96xf32>
    %5 = vector.broadcast %4 : vector<1x96xf32> to vector<16x96xf32>
    %6 = arith.addf %3, %5 : vector<16x96xf32>
    %7 = vector.extract_strided_slice %6 {offsets = [0, 0], sizes = [16, 32], strides = [1, 1]} : vector<16x96xf32> to vector<16x32xf32>
    %8 = vector.shape_cast %7 : vector<16x32xf32> to vector<2x8x32xf32>
    %9 = vector.extract_strided_slice %6 {offsets = [0, 32], sizes = [16, 32], strides = [1, 1]} : vector<16x96xf32> to vector<16x32xf32>
    %10 = vector.shape_cast %9 : vector<16x32xf32> to vector<2x8x32xf32>
    %11 = vector.extract_strided_slice %6 {offsets = [0, 64], sizes = [16, 32], strides = [1, 1]} : vector<16x96xf32> to vector<16x32xf32>
    %12 = vector.shape_cast %11 : vector<16x32xf32> to vector<2x8x32xf32>
    %13 = vector.extract_strided_slice %8 {offsets = [0, 0, 0], sizes = [2, 8, 8], strides = [1, 1, 1]} : vector<2x8x32xf32> to vector<2x8x8xf32>
    %14 = vector.extract_strided_slice %10 {offsets = [0, 0, 0], sizes = [2, 8, 8], strides = [1, 1, 1]} : vector<2x8x32xf32> to vector<2x8x8xf32>
    %15 = vector.extract_strided_slice %12 {offsets = [0, 0, 0], sizes = [2, 8, 8], strides = [1, 1, 1]} : vector<2x8x32xf32> to vector<2x8x8xf32>
    "tpu.trace_start"() <{level = 10 : i32, message = "bqd,bkd->bqk"}> : () -> ()
    %cst_6 = arith.constant dense<0.000000e+00> : vector<2x8x8xf32>
    %16 = tpu.matmul %13, %14, %cst_6 {dimension_numbers = #tpu.dot_dimension_numbers<[2], [2], [1], [1], [0, 0, 0, 1, 1, 1], [0], [0]>} : vector<2x8x8xf32>, vector<2x8x8xf32>, vector<2x8x8xf32> -> vector<2x8x8xf32>
    "tpu.trace_stop"() : () -> ()
    %cst_7 = arith.constant dense<0xFF800000> : vector<2x8xf32>
    %17 = vector.multi_reduction <maximumf>, %16, %cst_7 [2] : vector<2x8x8xf32> to vector<2x8xf32>
    %18 = vector.shape_cast %17 : vector<2x8xf32> to vector<2x8x1xf32>
    %19 = vector.broadcast %18 : vector<2x8x1xf32> to vector<2x8x8xf32>
    %20 = arith.subf %16, %19 : vector<2x8x8xf32>
    %21 = math.exp %20 : vector<2x8x8xf32>
    %cst_8 = arith.constant dense<0.000000e+00> : vector<2x8xf32>
    %22 = vector.multi_reduction <add>, %21, %cst_8 [2] : vector<2x8x8xf32> to vector<2x8xf32>
    %23 = vector.shape_cast %22 : vector<2x8xf32> to vector<2x8x1xf32>
    %24 = tpu.reciprocal %23 {approx = true} : vector<2x8x1xf32> -> vector<2x8x1xf32>
    %25 = vector.broadcast %24 : vector<2x8x1xf32> to vector<2x8x8xf32>
    %26 = arith.mulf %21, %25 : vector<2x8x8xf32>
    "tpu.trace_start"() <{level = 10 : i32, message = "bqk,bkd->bqd"}> : () -> ()
    %cst_9 = arith.constant dense<0.000000e+00> : vector<2x8x8xf32>
    %27 = tpu.matmul %26, %15, %cst_9 {dimension_numbers = #tpu.dot_dimension_numbers<[2], [1], [1], [2], [0, 0, 0, 1, 1, 2], [0], [0]>} : vector<2x8x8xf32>, vector<2x8x8xf32>, vector<2x8x8xf32> -> vector<2x8x8xf32>
    "tpu.trace_stop"() : () -> ()
    %28 = vector.extract_strided_slice %8 {offsets = [0, 0, 8], sizes = [2, 8, 8], strides = [1, 1, 1]} : vector<2x8x32xf32> to vector<2x8x8xf32>
    %29 = vector.extract_strided_slice %10 {offsets = [0, 0, 8], sizes = [2, 8, 8], strides = [1, 1, 1]} : vector<2x8x32xf32> to vector<2x8x8xf32>
    %30 = vector.extract_strided_slice %12 {offsets = [0, 0, 8], sizes = [2, 8, 8], strides = [1, 1, 1]} : vector<2x8x32xf32> to vector<2x8x8xf32>
    "tpu.trace_start"() <{level = 10 : i32, message = "bqd,bkd->bqk"}> : () -> ()
    %cst_10 = arith.constant dense<0.000000e+00> : vector<2x8x8xf32>
    %31 = tpu.matmul %28, %29, %cst_10 {dimension_numbers = #tpu.dot_dimension_numbers<[2], [2], [1], [1], [0, 0, 0, 1, 1, 1], [0], [0]>} : vector<2x8x8xf32>, vector<2x8x8xf32>, vector<2x8x8xf32> -> vector<2x8x8xf32>
    "tpu.trace_stop"() : () -> ()
    %cst_11 = arith.constant dense<0xFF800000> : vector<2x8xf32>
    %32 = vector.multi_reduction <maximumf>, %31, %cst_11 [2] : vector<2x8x8xf32> to vector<2x8xf32>
    %33 = vector.shape_cast %32 : vector<2x8xf32> to vector<2x8x1xf32>
    %34 = vector.broadcast %33 : vector<2x8x1xf32> to vector<2x8x8xf32>
    %35 = arith.subf %31, %34 : vector<2x8x8xf32>
    %36 = math.exp %35 : vector<2x8x8xf32>
    %cst_12 = arith.constant dense<0.000000e+00> : vector<2x8xf32>
    %37 = vector.multi_reduction <add>, %36, %cst_12 [2] : vector<2x8x8xf32> to vector<2x8xf32>
    %38 = vector.shape_cast %37 : vector<2x8xf32> to vector<2x8x1xf32>
    %39 = tpu.reciprocal %38 {approx = true} : vector<2x8x1xf32> -> vector<2x8x1xf32>
    %40 = vector.broadcast %39 : vector<2x8x1xf32> to vector<2x8x8xf32>
    %41 = arith.mulf %36, %40 : vector<2x8x8xf32>
    "tpu.trace_start"() <{level = 10 : i32, message = "bqk,bkd->bqd"}> : () -> ()
    %cst_13 = arith.constant dense<0.000000e+00> : vector<2x8x8xf32>
    %42 = tpu.matmul %41, %30, %cst_13 {dimension_numbers = #tpu.dot_dimension_numbers<[2], [1], [1], [2], [0, 0, 0, 1, 1, 2], [0], [0]>} : vector<2x8x8xf32>, vector<2x8x8xf32>, vector<2x8x8xf32> -> vector<2x8x8xf32>
    "tpu.trace_stop"() : () -> ()
    %43 = vector.extract_strided_slice %8 {offsets = [0, 0, 16], sizes = [2, 8, 8], strides = [1, 1, 1]} : vector<2x8x32xf32> to vector<2x8x8xf32>
    %44 = vector.extract_strided_slice %10 {offsets = [0, 0, 16], sizes = [2, 8, 8], strides = [1, 1, 1]} : vector<2x8x32xf32> to vector<2x8x8xf32>
    %45 = vector.extract_strided_slice %12 {offsets = [0, 0, 16], sizes = [2, 8, 8], strides = [1, 1, 1]} : vector<2x8x32xf32> to vector<2x8x8xf32>
    "tpu.trace_start"() <{level = 10 : i32, message = "bqd,bkd->bqk"}> : () -> ()
    %cst_14 = arith.constant dense<0.000000e+00> : vector<2x8x8xf32>
    %46 = tpu.matmul %43, %44, %cst_14 {dimension_numbers = #tpu.dot_dimension_numbers<[2], [2], [1], [1], [0, 0, 0, 1, 1, 1], [0], [0]>} : vector<2x8x8xf32>, vector<2x8x8xf32>, vector<2x8x8xf32> -> vector<2x8x8xf32>
    "tpu.trace_stop"() : () -> ()
    %cst_15 = arith.constant dense<0xFF800000> : vector<2x8xf32>
    %47 = vector.multi_reduction <maximumf>, %46, %cst_15 [2] : vector<2x8x8xf32> to vector<2x8xf32>
    %48 = vector.shape_cast %47 : vector<2x8xf32> to vector<2x8x1xf32>
    %49 = vector.broadcast %48 : vector<2x8x1xf32> to vector<2x8x8xf32>
    %50 = arith.subf %46, %49 : vector<2x8x8xf32>
    %51 = math.exp %50 : vector<2x8x8xf32>
    %cst_16 = arith.constant dense<0.000000e+00> : vector<2x8xf32>
    %52 = vector.multi_reduction <add>, %51, %cst_16 [2] : vector<2x8x8xf32> to vector<2x8xf32>
    %53 = vector.shape_cast %52 : vector<2x8xf32> to vector<2x8x1xf32>
    %54 = tpu.reciprocal %53 {approx = true} : vector<2x8x1xf32> -> vector<2x8x1xf32>
    %55 = vector.broadcast %54 : vector<2x8x1xf32> to vector<2x8x8xf32>
    %56 = arith.mulf %51, %55 : vector<2x8x8xf32>
    "tpu.trace_start"() <{level = 10 : i32, message = "bqk,bkd->bqd"}> : () -> ()
    %cst_17 = arith.constant dense<0.000000e+00> : vector<2x8x8xf32>
    %57 = tpu.matmul %56, %45, %cst_17 {dimension_numbers = #tpu.dot_dimension_numbers<[2], [1], [1], [2], [0, 0, 0, 1, 1, 2], [0], [0]>} : vector<2x8x8xf32>, vector<2x8x8xf32>, vector<2x8x8xf32> -> vector<2x8x8xf32>
    "tpu.trace_stop"() : () -> ()
    %58 = vector.extract_strided_slice %8 {offsets = [0, 0, 24], sizes = [2, 8, 8], strides = [1, 1, 1]} : vector<2x8x32xf32> to vector<2x8x8xf32>
    %59 = vector.extract_strided_slice %10 {offsets = [0, 0, 24], sizes = [2, 8, 8], strides = [1, 1, 1]} : vector<2x8x32xf32> to vector<2x8x8xf32>
    %60 = vector.extract_strided_slice %12 {offsets = [0, 0, 24], sizes = [2, 8, 8], strides = [1, 1, 1]} : vector<2x8x32xf32> to vector<2x8x8xf32>
    "tpu.trace_start"() <{level = 10 : i32, message = "bqd,bkd->bqk"}> : () -> ()
    %cst_18 = arith.constant dense<0.000000e+00> : vector<2x8x8xf32>
    %61 = tpu.matmul %58, %59, %cst_18 {dimension_numbers = #tpu.dot_dimension_numbers<[2], [2], [1], [1], [0, 0, 0, 1, 1, 1], [0], [0]>} : vector<2x8x8xf32>, vector<2x8x8xf32>, vector<2x8x8xf32> -> vector<2x8x8xf32>
    "tpu.trace_stop"() : () -> ()
    %cst_19 = arith.constant dense<0xFF800000> : vector<2x8xf32>
    %62 = vector.multi_reduction <maximumf>, %61, %cst_19 [2] : vector<2x8x8xf32> to vector<2x8xf32>
    %63 = vector.shape_cast %62 : vector<2x8xf32> to vector<2x8x1xf32>
    %64 = vector.broadcast %63 : vector<2x8x1xf32> to vector<2x8x8xf32>
    %65 = arith.subf %61, %64 : vector<2x8x8xf32>
    %66 = math.exp %65 : vector<2x8x8xf32>
    %cst_20 = arith.constant dense<0.000000e+00> : vector<2x8xf32>
    %67 = vector.multi_reduction <add>, %66, %cst_20 [2] : vector<2x8x8xf32> to vector<2x8xf32>
    %68 = vector.shape_cast %67 : vector<2x8xf32> to vector<2x8x1xf32>
    %69 = tpu.reciprocal %68 {approx = true} : vector<2x8x1xf32> -> vector<2x8x1xf32>
    %70 = vector.broadcast %69 : vector<2x8x1xf32> to vector<2x8x8xf32>
    %71 = arith.mulf %66, %70 : vector<2x8x8xf32>
    "tpu.trace_start"() <{level = 10 : i32, message = "bqk,bkd->bqd"}> : () -> ()
    %cst_21 = arith.constant dense<0.000000e+00> : vector<2x8x8xf32>
    %72 = tpu.matmul %71, %60, %cst_21 {dimension_numbers = #tpu.dot_dimension_numbers<[2], [1], [1], [2], [0, 0, 0, 1, 1, 2], [0], [0]>} : vector<2x8x8xf32>, vector<2x8x8xf32>, vector<2x8x8xf32> -> vector<2x8x8xf32>
    "tpu.trace_stop"() : () -> ()
    %73 = tpu.concatenate %27, %42, %57, %72 in 2 : vector<2x8x8xf32>, vector<2x8x8xf32>, vector<2x8x8xf32>, vector<2x8x8xf32> -> vector<2x8x32xf32>
    %74 = vector.shape_cast %73 : vector<2x8x32xf32> to vector<16x32xf32>
    %c0_22 = arith.constant 0 : index
    %c0_23 = arith.constant 0 : index
    %75 = vector.load %arg4[%c0_22, %c0_23] : memref<32x32xf32, #tpu.memory_space<vmem>>, vector<32x32xf32>
    %cst_24 = arith.constant dense<0.000000e+00> : vector<16x32xf32>
    %76 = tpu.matmul %74, %75, %cst_24 {dimension_numbers = #tpu.dot_dimension_numbers<[1], [0], [0], [1], [0, 0, 1, 1], [], []>} : vector<16x32xf32>, vector<32x32xf32>, vector<16x32xf32> -> vector<16x32xf32>
    %c0_25 = arith.constant 0 : index
    %c0_26 = arith.constant 0 : index
    %77 = vector.load %arg5[%c0_25, %c0_26] : memref<1x32xf32, #tpu.memory_space<vmem>>, vector<1x32xf32>
    %78 = vector.broadcast %77 : vector<1x32xf32> to vector<16x32xf32>
    %79 = arith.addf %76, %78 : vector<16x32xf32>
    %80 = vector.shape_cast %79 : vector<16x32xf32> to vector<2x8x32xf32>
    %c0_27 = arith.constant 0 : index
    %c0_28 = arith.constant 0 : index
    %c0_29 = arith.constant 0 : index
    %81 = vector.load %arg6[%c0_27, %c0_28, %c0_29] : memref<2x8x32xf32, #tpu.memory_space<vmem>>, vector<2x8x32xf32>
    tpu.vector_store %arg6[%c0_27, %c0_28, %c0_29], %80 {strides = array<i32>} : memref<2x8x32xf32, #tpu.memory_space<vmem>>, vector<2x8x32xf32>,
    return
  }
  func.func @transform_0(%arg0: i32) -> (i32, i32, i32) {
    %c0_i32 = arith.constant 0 : i32
    %c0_i32_0 = arith.constant 0 : i32
    %c0_i32_1 = arith.constant 0 : i32
    return %arg0, %c0_i32, %c0_i32_0 : i32, i32, i32
  }
  func.func @transform_1(%arg0: i32) -> (i32, i32) {
    %c0_i32 = arith.constant 0 : i32
    %c0_i32_0 = arith.constant 0 : i32
    %c0_i32_1 = arith.constant 0 : i32
    return %c0_i32, %c0_i32_0 : i32, i32
  }
  func.func @transform_2(%arg0: i32) -> (i32, i32) {
    %c0_i32 = arith.constant 0 : i32
    %c0_i32_0 = arith.constant 0 : i32
    %c0_i32_1 = arith.constant 0 : i32
    return %c0_i32, %c0_i32_0 : i32, i32
  }
  func.func @transform_3(%arg0: i32) -> (i32, i32) {
    %c0_i32 = arith.constant 0 : i32
    %c0_i32_0 = arith.constant 0 : i32
    %c0_i32_1 = arith.constant 0 : i32
    return %c0_i32, %c0_i32_0 : i32, i32
  }
  func.func @transform_4(%arg0: i32) -> (i32, i32) {
    %c0_i32 = arith.constant 0 : i32
    %c0_i32_0 = arith.constant 0 : i32
    %c0_i32_1 = arith.constant 0 : i32
    return %c0_i32, %c0_i32_0 : i32, i32
  }
  func.func @transform_5(%arg0: i32) -> (i32, i32, i32) {
    %c0_i32 = arith.constant 0 : i32
    %c0_i32_0 = arith.constant 0 : i32
    %c0_i32_1 = arith.constant 0 : i32
    return %arg0, %c0_i32, %c0_i32_0 : i32, i32, i32
  }
}

</mosaic_0001>

<llo_original>
// kernel: _self_attention_forward.1
$region0: #{_self_attention_forward.1}
  #allocation0 [shape = 'u32[]', space=smem, size = 0x4, offset = 0x4, fixed_abs, tag = 'smem constant byte address 0x4 - core index']
  #allocation1 [shape = 'u32[72,128]{1,0:T(1,128)}', space=vmem, size = 0x9000, scoped, tag = 'internal scratch']
  %s0 = inlined_call_operand.hbm [shape: f32[2,8,32], index: 0, kind: input, shape index: {}]
  %s1 = inlined_call_operand.hbm [shape: f32[32,96], index: 1, kind: input, shape index: {}]
  %s2 = inlined_call_operand.vmem [shape: f32[1,96], index: 2, kind: input, shape index: {}]
  %s3 = inlined_call_operand.hbm [shape: f32[32,32], index: 3, kind: input, shape index: {}]
  %s4 = inlined_call_operand.hbm [shape: f32[1,32], index: 4, kind: input, shape index: {}]
  %s5 = inlined_call_operand.hbm [shape: f32[2,8,32], index: 5, kind: output, shape index: {}]
  %s6 = sld [smem:[#allocation0]]
  $region46: #{_self_attention_forward.1} parent=0
    _
  %s8 = ssub.s32 1, %s6
  %s9 = scalar_select 0, %s8, %s6
  $region1: #{_self_attention_forward.1} parent=0
    #allocation2 [shape = 'u8[8192]{0}', space=vmem, size = 0x2000, scoped, tag = 'input window, operand 0, single buffered']
    #allocation3 [shape = 's32[1]{0}', space=sflag, size = 0x4, scoped, tag = 'scoped memory for _self_attention_forward.1']
    #allocation4 [shape = 's32[1]{0}', space=sflag, size = 0x4, scoped, tag = 'scoped memory for _self_attention_forward.1']
    #allocation5 [shape = 'u8[16384]{0}', space=vmem, size = 0x4000, scoped, tag = 'input window, operand 1, single buffered']
    #allocation6 [shape = 's32[1]{0}', space=sflag, size = 0x4, scoped, tag = 'scoped memory for _self_attention_forward.1']
    #allocation7 [shape = 'u8[16384]{0}', space=vmem, size = 0x4000, scoped, tag = 'input window, operand 3, single buffered']
    #allocation8 [shape = 'u8[512]{0}', space=vmem, size = 0x400, scoped, tag = 'input window, operand 4, single buffered']
    #allocation9 [shape = 's32[1]{0}', space=sflag, size = 0x4, scoped, tag = 'scoped memory for _self_attention_forward.1']
    #allocation10 [shape = 'u8[8192]{0}', space=vmem, size = 0x2000, scoped, tag = 'output window, operand 0, single buffered']
    %10 = vsyncpa [#allocation3], 0
    %11 = vsyncpa [#allocation6], 0
    %12 = vsyncpa [#allocation9], 0
    %13 = vsyncpa [#allocation4], 0
    // Predicated region
    $region2: #{_self_attention_forward.1} parent=1 // pred_check
      _
    $region3: #{_self_attention_forward.1} parent=1 // pred_check_branch
      %15 = sbr.rel (0) target = $region5
    $region4: #{_self_attention_forward.1} parent=1 // pred_region
      %17 = vsyncadd [#allocation3], 0
      %s18 = sshll.u32 %s0, 4
      %s19 = int_to_ptr.hbm [resolvable:$true] %s18
      %s20 = sshll.u32 [#allocation2], 4
      %s21 = int_to_ptr.vmem [resolvable:$true] %s20
      %26 = dma.hbm_to_vmem [thread:$0]  %s19, 256, %s21, [#allocation3], 128, 128, 8
    $region5: #{_self_attention_forward.1} parent=1 // pred_fallthru
      _
    // Predicated region
    $region6: #{_self_attention_forward.1} parent=1 // pred_check
      _
    $region7: #{_self_attention_forward.1} parent=1 // pred_check_branch
      %28 = sbr.rel (0) target = $region9
    $region8: #{_self_attention_forward.1} parent=1 // pred_region
      %30 = vsyncadd [#allocation6], 0
      %s31 = sshll.u32 %s1, 4
      %s32 = int_to_ptr.hbm [resolvable:$true] %s31
      %s33 = sshll.u32 [#allocation5], 4
      %s34 = int_to_ptr.vmem [resolvable:$true] %s33
      %39 = dma.hbm_to_vmem [thread:$0]  %s32, 512, %s34, [#allocation6], 128, 128, 8
    $region9: #{_self_attention_forward.1} parent=1 // pred_fallthru
      _
    // Predicated region
    $region10: #{_self_attention_forward.1} parent=1 // pred_check
      _
    $region11: #{_self_attention_forward.1} parent=1 // pred_check_branch
      %41 = sbr.rel (0) target = $region13
    $region12: #{_self_attention_forward.1} parent=1 // pred_region
      _
    $region13: #{_self_attention_forward.1} parent=1 // pred_fallthru
      _
    // Predicated region
    $region14: #{_self_attention_forward.1} parent=1 // pred_check
      _
    $region15: #{_self_attention_forward.1} parent=1 // pred_check_branch
      %43 = sbr.rel (0) target = $region17
    $region16: #{_self_attention_forward.1} parent=1 // pred_region
      %45 = vsyncadd [#allocation6], 0
      %s46 = sshll.u32 %s3, 4
      %s47 = int_to_ptr.hbm [resolvable:$true] %s46
      %s48 = sshll.u32 [#allocation7], 4
      %s49 = int_to_ptr.vmem [resolvable:$true] %s48
      %54 = dma.hbm_to_vmem [thread:$0]  %s47, 512, %s49, [#allocation6], 128, 128, 8
    $region17: #{_self_attention_forward.1} parent=1 // pred_fallthru
      _
    // Predicated region
    $region18: #{_self_attention_forward.1} parent=1 // pred_check
      _
    $region19: #{_self_attention_forward.1} parent=1 // pred_check_branch
      %56 = sbr.rel (0) target = $region21
    $region20: #{_self_attention_forward.1} parent=1 // pred_region
      %58 = vsyncadd [#allocation9], 0
      %s60 = sshll.u32 %s4, 4
      %s61 = int_to_ptr.hbm [resolvable:$true] %s60
      %s62 = sshll.u32 [#allocation8], 4
      %s63 = int_to_ptr.vmem [resolvable:$true] %s62
      %65 = dma.hbm_to_vmem [thread:$0]  %s61, 16, %s63, [#allocation9]
    $region21: #{_self_attention_forward.1} parent=1 // pred_fallthru
      _
    // Predicated region
    $region22: #{_self_attention_forward.1} parent=1 // pred_check
      _
    $region23: #{_self_attention_forward.1} parent=1 // pred_check_branch
      %67 = sbr.rel (0) target = $region25
    $region24: #{_self_attention_forward.1} parent=1 // pred_region
      %69 = dma.done [#allocation3], 256
    $region25: #{_self_attention_forward.1} parent=1 // pred_fallthru
      _
    // Predicated region
    $region26: #{_self_attention_forward.1} parent=1 // pred_check
      _
    $region27: #{_self_attention_forward.1} parent=1 // pred_check_branch
      %71 = sbr.rel (0) target = $region29
    $region28: #{_self_attention_forward.1} parent=1 // pred_region
      %73 = dma.done [#allocation6], 512
    $region29: #{_self_attention_forward.1} parent=1 // pred_fallthru
      _
    // Predicated region
    $region30: #{_self_attention_forward.1} parent=1 // pred_check
      _
    $region31: #{_self_attention_forward.1} parent=1 // pred_check_branch
      %75 = sbr.rel (0) target = $region33
    $region32: #{_self_attention_forward.1} parent=1 // pred_region
      %77 = dma.done [#allocation6], 512
    $region33: #{_self_attention_forward.1} parent=1 // pred_fallthru
      _
    // Predicated region
    $region34: #{_self_attention_forward.1} parent=1 // pred_check
      _
    $region35: #{_self_attention_forward.1} parent=1 // pred_check_branch
      %79 = sbr.rel (0) target = $region37
    $region36: #{_self_attention_forward.1} parent=1 // pred_region
      %81 = dma.done [#allocation9], 16
    $region37: #{_self_attention_forward.1} parent=1 // pred_fallthru
      _
    %v82 = vld [vmem:[#allocation2] sm:$0xff]
    %v83 = vld [vmem:[#allocation2 + $0x8] sm:$0xff]
    %v84 = vld [vmem:[#allocation5] sm:$0xff]
    %v85 = vld [vmem:[#allocation5 + $0x8] sm:$0xff]
    %v86 = vld [vmem:[#allocation5 + $0x10] sm:$0xff]
    %v87 = vld [vmem:[#allocation5 + $0x18] sm:$0xff]
    %v88 = vld [vmem:[%s2] sm:$0x1]
    %v90 = vperm.slane %v88, 0
    %vm92 = vcmask 261120
    %v94 = vsel %vm92, %v82, 0
    %v97 = vsel %vm92, %v83, 0
    %99 = vmatpush.msra.mxu0 0.0
    %100 = vmatpush.msra.mxu0 0.0
    %101 = vmatpush.msra.mxu0 0.0
    %102 = vmatpush.msra.mxu0 0.0
    %103 = vmatpush.msra.mxu0 0.0
    %104 = vmatpush.msra.mxu0 0.0
    %105 = vmatpush.msra.mxu0 0.0
    %106 = vmatpush.msra.mxu0 0.0
    %107 = vmatpush.msra.mxu0 0.0
    %108 = vmatpush.msra.mxu0 0.0
    %109 = vmatpush.msra.mxu0 0.0
    %110 = vmatpush.msra.mxu0 0.0
    %111 = vmatpush.msra.mxu0 %v87
    %112 = vmatpush.msra.mxu0 %v86
    %113 = vmatpush.msra.mxu0 %v85
    %114 = vmatpush.msra.mxu0 %v84
    %115 = vmatmul.f32.gmra.mxu0 %v94
    %v116 = vpop.f32.mrf.mxu0
    %v117 = vadd.f32 %v90, %v116
    %118 = vmatmul.f32.gmra.mxu0 %v97
    %v119 = vpop.f32.mrf.mxu0
    %v120 = vadd.f32 %v90, %v119
    %121 = vdwg.mxu0
    %123 = vrot.lane.b32.xlu0 %v117, 96
    %v124 = vpop.permute.xlu0 %123
    %vm125 = vcmask 64512
    %v126 = vsel %vm125, %v117, 0
    %v128 = vsel %vm125, %v124, 0
    %130 = vmatpush.xpose.msra.mxu0 0.0
    %131 = vmatpush.xpose.msra.mxu0 0.0
    %132 = vmatpush.xpose.msra.mxu0 0.0
    %133 = vmatpush.xpose.msra.mxu0 0.0
    %134 = vmatpush.xpose.msra.mxu0 0.0
    %135 = vmatpush.xpose.msra.mxu0 0.0
    %136 = vmatpush.xpose.msra.mxu0 0.0
    %137 = vmatpush.xpose.msra.mxu0 0.0
    %138 = vmatpush.xpose.msra.mxu0 0.0
    %139 = vmatpush.xpose.msra.mxu0 0.0
    %140 = vmatpush.xpose.msra.mxu0 0.0
    %141 = vmatpush.xpose.msra.mxu0 0.0
    %142 = vmatpush.xpose.msra.mxu0 0.0
    %143 = vmatpush.xpose.msra.mxu0 0.0
    %144 = vmatpush.xpose.msra.mxu0 0.0
    %145 = vmatpush.xpose.msra.mxu0 %v128
    %146 = vmatmul.f32.gmra.mxu0 %v126
    %v147 = vpop.f32.mrf.mxu0
    %v148 = vadd.f32 0.0, %v147
    %149 = vdwg.mxu0
    %151 = vrot.lane.b32.xlu0 %v120, 96
    %v152 = vpop.permute.xlu0 %151
    %v153 = vsel %vm125, %v120, 0
    %v155 = vsel %vm125, %v152, 0
    %157 = vmatpush.xpose.msra.mxu0 0.0
    %158 = vmatpush.xpose.msra.mxu0 0.0
    %159 = vmatpush.xpose.msra.mxu0 0.0
    %160 = vmatpush.xpose.msra.mxu0 0.0
    %161 = vmatpush.xpose.msra.mxu0 0.0
    %162 = vmatpush.xpose.msra.mxu0 0.0
    %163 = vmatpush.xpose.msra.mxu0 0.0
    %164 = vmatpush.xpose.msra.mxu0 0.0
    %165 = vmatpush.xpose.msra.mxu0 0.0
    %166 = vmatpush.xpose.msra.mxu0 0.0
    %167 = vmatpush.xpose.msra.mxu0 0.0
    %168 = vmatpush.xpose.msra.mxu0 0.0
    %169 = vmatpush.xpose.msra.mxu0 0.0
    %170 = vmatpush.xpose.msra.mxu0 0.0
    %171 = vmatpush.xpose.msra.mxu0 0.0
    %172 = vmatpush.xpose.msra.mxu0 %v155
    %173 = vmatmul.f32.gmra.mxu0 %v153
    %v174 = vpop.f32.mrf.mxu0
    %v175 = vadd.f32 0.0, %v174
    %176 = vdwg.mxu0
    %v177 = vsel %vm125, %v148, -inf
    %178 = vmax.xlane.f32.xlu0 %v177
    %v179 = vpop.xlane.xlu0 %178
    %v180 = vsel %vm125, %v175, -inf
    %181 = vmax.xlane.f32.xlu0 %v180
    %v182 = vpop.xlane.xlu0 %181
    %v183 = vsub.f32 %v148, %v179
    %v184 = vsub.f32 %v175, %v182
    %v185 = vmul.f32 %v183, 1.442695
    %v186 = vpow.pop %v185
    %v187 = vmul.f32 %v184, 1.442695
    %v188 = vpow.pop %v187
    %v189 = vsel %vm125, %v186, 0.0
    %190 = vadd.xlane.f32.xlu0 %v189
    %v191 = vpop.xlane.xlu0 %190
    %v192 = vsel %vm125, %v188, 0.0
    %193 = vadd.xlane.f32.xlu0 %v192
    %v194 = vpop.xlane.xlu0 %193
    %v195 = vrcp.pop %v191
    %v196 = vrcp.pop %v194
    %v197 = vmul.f32 %v186, %v195
    %v198 = vmul.f32 %v188, %v196
    %199 = vrot.lane.b32.xlu0 %v117, 64
    %v200 = vpop.permute.xlu0 %199
    %v203 = vsel %vm125, %v197, 0
    %205 = vmatpush.msra.mxu0 0.0
    %206 = vmatpush.msra.mxu0 0.0
    %207 = vmatpush.msra.mxu0 0.0
    %208 = vmatpush.msra.mxu0 0.0
    %209 = vmatpush.msra.mxu0 0.0
    %210 = vmatpush.msra.mxu0 0.0
    %211 = vmatpush.msra.mxu0 0.0
    %212 = vmatpush.msra.mxu0 0.0
    %213 = vmatpush.msra.mxu0 0.0
    %214 = vmatpush.msra.mxu0 0.0
    %215 = vmatpush.msra.mxu0 0.0
    %216 = vmatpush.msra.mxu0 0.0
    %217 = vmatpush.msra.mxu0 0.0
    %218 = vmatpush.msra.mxu0 0.0
    %219 = vmatpush.msra.mxu0 0.0
    %220 = vmatpush.msra.mxu0 %v200
    %221 = vmatmul.f32.gmra.mxu0 %v203
    %v222 = vpop.f32.mrf.mxu0
    %v223 = vadd.f32 0.0, %v222
    %224 = vdwg.mxu0
    %225 = vrot.lane.b32.xlu0 %v120, 64
    %v226 = vpop.permute.xlu0 %225
    %v229 = vsel %vm125, %v198, 0
    %231 = vmatpush.msra.mxu0 0.0
    %232 = vmatpush.msra.mxu0 0.0
    %233 = vmatpush.msra.mxu0 0.0
    %234 = vmatpush.msra.mxu0 0.0
    %235 = vmatpush.msra.mxu0 0.0
    %236 = vmatpush.msra.mxu0 0.0
    %237 = vmatpush.msra.mxu0 0.0
    %238 = vmatpush.msra.mxu0 0.0
    %239 = vmatpush.msra.mxu0 0.0
    %240 = vmatpush.msra.mxu0 0.0
    %241 = vmatpush.msra.mxu0 0.0
    %242 = vmatpush.msra.mxu0 0.0
    %243 = vmatpush.msra.mxu0 0.0
    %244 = vmatpush.msra.mxu0 0.0
    %245 = vmatpush.msra.mxu0 0.0
    %246 = vmatpush.msra.mxu0 %v226
    %247 = vmatmul.f32.gmra.mxu0 %v229
    %v248 = vpop.f32.mrf.mxu0
    %v249 = vadd.f32 0.0, %v248
    %250 = vdwg.mxu0
    %251 = vrot.lane.b32.xlu0 %v117, 120
    %v252 = vpop.permute.xlu0 %251
    %253 = vrot.lane.b32.xlu0 %v117, 88
    %v254 = vpop.permute.xlu0 %253
    %v255 = vsel %vm125, %v252, 0
    %v257 = vsel %vm125, %v254, 0
    %259 = vmatpush.xpose.msra.mxu0 0.0
    %260 = vmatpush.xpose.msra.mxu0 0.0
    %261 = vmatpush.xpose.msra.mxu0 0.0
    %262 = vmatpush.xpose.msra.mxu0 0.0
    %263 = vmatpush.xpose.msra.mxu0 0.0
    %264 = vmatpush.xpose.msra.mxu0 0.0
    %265 = vmatpush.xpose.msra.mxu0 0.0
    %266 = vmatpush.xpose.msra.mxu0 0.0
    %267 = vmatpush.xpose.msra.mxu0 0.0
    %268 = vmatpush.xpose.msra.mxu0 0.0
    %269 = vmatpush.xpose.msra.mxu0 0.0
    %270 = vmatpush.xpose.msra.mxu0 0.0
    %271 = vmatpush.xpose.msra.mxu0 0.0
    %272 = vmatpush.xpose.msra.mxu0 0.0
    %273 = vmatpush.xpose.msra.mxu0 0.0
    %274 = vmatpush.xpose.msra.mxu0 %v257
    %275 = vmatmul.f32.gmra.mxu0 %v255
    %v276 = vpop.f32.mrf.mxu0
    %v277 = vadd.f32 0.0, %v276
    %278 = vdwg.mxu0
    %279 = vrot.lane.b32.xlu0 %v120, 120
    %v280 = vpop.permute.xlu0 %279
    %281 = vrot.lane.b32.xlu0 %v120, 88
    %v282 = vpop.permute.xlu0 %281
    %v283 = vsel %vm125, %v280, 0
    %v285 = vsel %vm125, %v282, 0
    %287 = vmatpush.xpose.msra.mxu0 0.0
    %288 = vmatpush.xpose.msra.mxu0 0.0
    %289 = vmatpush.xpose.msra.mxu0 0.0
    %290 = vmatpush.xpose.msra.mxu0 0.0
    %291 = vmatpush.xpose.msra.mxu0 0.0
    %292 = vmatpush.xpose.msra.mxu0 0.0
    %293 = vmatpush.xpose.msra.mxu0 0.0
    %294 = vmatpush.xpose.msra.mxu0 0.0
    %295 = vmatpush.xpose.msra.mxu0 0.0
    %296 = vmatpush.xpose.msra.mxu0 0.0
    %297 = vmatpush.xpose.msra.mxu0 0.0
    %298 = vmatpush.xpose.msra.mxu0 0.0
    %299 = vmatpush.xpose.msra.mxu0 0.0
    %300 = vmatpush.xpose.msra.mxu0 0.0
    %301 = vmatpush.xpose.msra.mxu0 0.0
    %302 = vmatpush.xpose.msra.mxu0 %v285
    %303 = vmatmul.f32.gmra.mxu0 %v283
    %v304 = vpop.f32.mrf.mxu0
    %v305 = vadd.f32 0.0, %v304
    %306 = vdwg.mxu0
    %v307 = vsel %vm125, %v277, -inf
    %308 = vmax.xlane.f32.xlu0 %v307
    %v309 = vpop.xlane.xlu0 %308
    %v310 = vsel %vm125, %v305, -inf
    %311 = vmax.xlane.f32.xlu0 %v310
    %v312 = vpop.xlane.xlu0 %311
    %v313 = vsub.f32 %v277, %v309
    %v314 = vsub.f32 %v305, %v312
    %v315 = vmul.f32 %v313, 1.442695
    %v316 = vpow.pop %v315
    %v317 = vmul.f32 %v314, 1.442695
    %v318 = vpow.pop %v317
    %v319 = vsel %vm125, %v316, 0.0
    %320 = vadd.xlane.f32.xlu0 %v319
    %v321 = vpop.xlane.xlu0 %320
    %v322 = vsel %vm125, %v318, 0.0
    %323 = vadd.xlane.f32.xlu0 %v322
    %v324 = vpop.xlane.xlu0 %323
    %v325 = vrcp.pop %v321
    %v326 = vrcp.pop %v324
    %v327 = vmul.f32 %v316, %v325
    %v328 = vmul.f32 %v318, %v326
    %329 = vrot.lane.b32.xlu0 %v117, 56
    %v330 = vpop.permute.xlu0 %329
    %v333 = vsel %vm125, %v327, 0
    %335 = vmatpush.msra.mxu0 0.0
    %336 = vmatpush.msra.mxu0 0.0
    %337 = vmatpush.msra.mxu0 0.0
    %338 = vmatpush.msra.mxu0 0.0
    %339 = vmatpush.msra.mxu0 0.0
    %340 = vmatpush.msra.mxu0 0.0
    %341 = vmatpush.msra.mxu0 0.0
    %342 = vmatpush.msra.mxu0 0.0
    %343 = vmatpush.msra.mxu0 0.0
    %344 = vmatpush.msra.mxu0 0.0
    %345 = vmatpush.msra.mxu0 0.0
    %346 = vmatpush.msra.mxu0 0.0
    %347 = vmatpush.msra.mxu0 0.0
    %348 = vmatpush.msra.mxu0 0.0
    %349 = vmatpush.msra.mxu0 0.0
    %350 = vmatpush.msra.mxu0 %v330
    %351 = vmatmul.f32.gmra.mxu0 %v333
    %v352 = vpop.f32.mrf.mxu0
    %v353 = vadd.f32 0.0, %v352
    %354 = vdwg.mxu0
    %355 = vrot.lane.b32.xlu0 %v120, 56
    %v356 = vpop.permute.xlu0 %355
    %v359 = vsel %vm125, %v328, 0
    %361 = vmatpush.msra.mxu0 0.0
    %362 = vmatpush.msra.mxu0 0.0
    %363 = vmatpush.msra.mxu0 0.0
    %364 = vmatpush.msra.mxu0 0.0
    %365 = vmatpush.msra.mxu0 0.0
    %366 = vmatpush.msra.mxu0 0.0
    %367 = vmatpush.msra.mxu0 0.0
    %368 = vmatpush.msra.mxu0 0.0
    %369 = vmatpush.msra.mxu0 0.0
    %370 = vmatpush.msra.mxu0 0.0
    %371 = vmatpush.msra.mxu0 0.0
    %372 = vmatpush.msra.mxu0 0.0
    %373 = vmatpush.msra.mxu0 0.0
    %374 = vmatpush.msra.mxu0 0.0
    %375 = vmatpush.msra.mxu0 0.0
    %376 = vmatpush.msra.mxu0 %v356
    %377 = vmatmul.f32.gmra.mxu0 %v359
    %v378 = vpop.f32.mrf.mxu0
    %v379 = vadd.f32 0.0, %v378
    %380 = vdwg.mxu0
    %381 = vrot.lane.b32.xlu0 %v117, 112
    %v382 = vpop.permute.xlu0 %381
    %383 = vrot.lane.b32.xlu0 %v117, 80
    %v384 = vpop.permute.xlu0 %383
    %v385 = vsel %vm125, %v382, 0
    %v387 = vsel %vm125, %v384, 0
    %389 = vmatpush.xpose.msra.mxu0 0.0
    %390 = vmatpush.xpose.msra.mxu0 0.0
    %391 = vmatpush.xpose.msra.mxu0 0.0
    %392 = vmatpush.xpose.msra.mxu0 0.0
    %393 = vmatpush.xpose.msra.mxu0 0.0
    %394 = vmatpush.xpose.msra.mxu0 0.0
    %395 = vmatpush.xpose.msra.mxu0 0.0
    %396 = vmatpush.xpose.msra.mxu0 0.0
    %397 = vmatpush.xpose.msra.mxu0 0.0
    %398 = vmatpush.xpose.msra.mxu0 0.0
    %399 = vmatpush.xpose.msra.mxu0 0.0
    %400 = vmatpush.xpose.msra.mxu0 0.0
    %401 = vmatpush.xpose.msra.mxu0 0.0
    %402 = vmatpush.xpose.msra.mxu0 0.0
    %403 = vmatpush.xpose.msra.mxu0 0.0
    %404 = vmatpush.xpose.msra.mxu0 %v387
    %405 = vmatmul.f32.gmra.mxu0 %v385
    %v406 = vpop.f32.mrf.mxu0
    %v407 = vadd.f32 0.0, %v406
    %408 = vdwg.mxu0
    %409 = vrot.lane.b32.xlu0 %v120, 112
    %v410 = vpop.permute.xlu0 %409
    %411 = vrot.lane.b32.xlu0 %v120, 80
    %v412 = vpop.permute.xlu0 %411
    %v413 = vsel %vm125, %v410, 0
    %v415 = vsel %vm125, %v412, 0
    %417 = vmatpush.xpose.msra.mxu0 0.0
    %418 = vmatpush.xpose.msra.mxu0 0.0
    %419 = vmatpush.xpose.msra.mxu0 0.0
    %420 = vmatpush.xpose.msra.mxu0 0.0
    %421 = vmatpush.xpose.msra.mxu0 0.0
    %422 = vmatpush.xpose.msra.mxu0 0.0
    %423 = vmatpush.xpose.msra.mxu0 0.0
    %424 = vmatpush.xpose.msra.mxu0 0.0
    %425 = vmatpush.xpose.msra.mxu0 0.0
    %426 = vmatpush.xpose.msra.mxu0 0.0
    %427 = vmatpush.xpose.msra.mxu0 0.0
    %428 = vmatpush.xpose.msra.mxu0 0.0
    %429 = vmatpush.xpose.msra.mxu0 0.0
    %430 = vmatpush.xpose.msra.mxu0 0.0
    %431 = vmatpush.xpose.msra.mxu0 0.0
    %432 = vmatpush.xpose.msra.mxu0 %v415
    %433 = vmatmul.f32.gmra.mxu0 %v413
    %v434 = vpop.f32.mrf.mxu0
    %v435 = vadd.f32 0.0, %v434
    %436 = vdwg.mxu0
    %v437 = vsel %vm125, %v407, -inf
    %438 = vmax.xlane.f32.xlu0 %v437
    %v439 = vpop.xlane.xlu0 %438
    %v440 = vsel %vm125, %v435, -inf
    %441 = vmax.xlane.f32.xlu0 %v440
    %v442 = vpop.xlane.xlu0 %441
    %v443 = vsub.f32 %v407, %v439
    %v444 = vsub.f32 %v435, %v442
    %v445 = vmul.f32 %v443, 1.442695
    %v446 = vpow.pop %v445
    %v447 = vmul.f32 %v444, 1.442695
    %v448 = vpow.pop %v447
    %v449 = vsel %vm125, %v446, 0.0
    %450 = vadd.xlane.f32.xlu0 %v449
    %v451 = vpop.xlane.xlu0 %450
    %v452 = vsel %vm125, %v448, 0.0
    %453 = vadd.xlane.f32.xlu0 %v452
    %v454 = vpop.xlane.xlu0 %453
    %v455 = vrcp.pop %v451
    %v456 = vrcp.pop %v454
    %v457 = vmul.f32 %v446, %v455
    %v458 = vmul.f32 %v448, %v456
    %459 = vrot.lane.b32.xlu0 %v117, 48
    %v460 = vpop.permute.xlu0 %459
    %v463 = vsel %vm125, %v457, 0
    %465 = vmatpush.msra.mxu0 0.0
    %466 = vmatpush.msra.mxu0 0.0
    %467 = vmatpush.msra.mxu0 0.0
    %468 = vmatpush.msra.mxu0 0.0
    %469 = vmatpush.msra.mxu0 0.0
    %470 = vmatpush.msra.mxu0 0.0
    %471 = vmatpush.msra.mxu0 0.0
    %472 = vmatpush.msra.mxu0 0.0
    %473 = vmatpush.msra.mxu0 0.0
    %474 = vmatpush.msra.mxu0 0.0
    %475 = vmatpush.msra.mxu0 0.0
    %476 = vmatpush.msra.mxu0 0.0
    %477 = vmatpush.msra.mxu0 0.0
    %478 = vmatpush.msra.mxu0 0.0
    %479 = vmatpush.msra.mxu0 0.0
    %480 = vmatpush.msra.mxu0 %v460
    %481 = vmatmul.f32.gmra.mxu0 %v463
    %v482 = vpop.f32.mrf.mxu0
    %v483 = vadd.f32 0.0, %v482
    %484 = vdwg.mxu0
    %485 = vrot.lane.b32.xlu0 %v120, 48
    %v486 = vpop.permute.xlu0 %485
    %v489 = vsel %vm125, %v458, 0
    %491 = vmatpush.msra.mxu0 0.0
    %492 = vmatpush.msra.mxu0 0.0
    %493 = vmatpush.msra.mxu0 0.0
    %494 = vmatpush.msra.mxu0 0.0
    %495 = vmatpush.msra.mxu0 0.0
    %496 = vmatpush.msra.mxu0 0.0
    %497 = vmatpush.msra.mxu0 0.0
    %498 = vmatpush.msra.mxu0 0.0
    %499 = vmatpush.msra.mxu0 0.0
    %500 = vmatpush.msra.mxu0 0.0
    %501 = vmatpush.msra.mxu0 0.0
    %502 = vmatpush.msra.mxu0 0.0
    %503 = vmatpush.msra.mxu0 0.0
    %504 = vmatpush.msra.mxu0 0.0
    %505 = vmatpush.msra.mxu0 0.0
    %506 = vmatpush.msra.mxu0 %v486
    %507 = vmatmul.f32.gmra.mxu0 %v489
    %v508 = vpop.f32.mrf.mxu0
    %v509 = vadd.f32 0.0, %v508
    %510 = vdwg.mxu0
    %511 = vrot.lane.b32.xlu0 %v117, 104
    %v512 = vpop.permute.xlu0 %511
    %513 = vrot.lane.b32.xlu0 %v117, 72
    %v514 = vpop.permute.xlu0 %513
    %v515 = vsel %vm125, %v512, 0
    %v517 = vsel %vm125, %v514, 0
    %519 = vmatpush.xpose.msra.mxu0 0.0
    %520 = vmatpush.xpose.msra.mxu0 0.0
    %521 = vmatpush.xpose.msra.mxu0 0.0
    %522 = vmatpush.xpose.msra.mxu0 0.0
    %523 = vmatpush.xpose.msra.mxu0 0.0
    %524 = vmatpush.xpose.msra.mxu0 0.0
    %525 = vmatpush.xpose.msra.mxu0 0.0
    %526 = vmatpush.xpose.msra.mxu0 0.0
    %527 = vmatpush.xpose.msra.mxu0 0.0
    %528 = vmatpush.xpose.msra.mxu0 0.0
    %529 = vmatpush.xpose.msra.mxu0 0.0
    %530 = vmatpush.xpose.msra.mxu0 0.0
    %531 = vmatpush.xpose.msra.mxu0 0.0
    %532 = vmatpush.xpose.msra.mxu0 0.0
    %533 = vmatpush.xpose.msra.mxu0 0.0
    %534 = vmatpush.xpose.msra.mxu0 %v517
    %535 = vmatmul.f32.gmra.mxu0 %v515
    %v536 = vpop.f32.mrf.mxu0
    %v537 = vadd.f32 0.0, %v536
    %538 = vdwg.mxu0
    %539 = vrot.lane.b32.xlu0 %v120, 104
    %v540 = vpop.permute.xlu0 %539
    %541 = vrot.lane.b32.xlu0 %v120, 72
    %v542 = vpop.permute.xlu0 %541
    %v543 = vsel %vm125, %v540, 0
    %v545 = vsel %vm125, %v542, 0
    %547 = vmatpush.xpose.msra.mxu0 0.0
    %548 = vmatpush.xpose.msra.mxu0 0.0
    %549 = vmatpush.xpose.msra.mxu0 0.0
    %550 = vmatpush.xpose.msra.mxu0 0.0
    %551 = vmatpush.xpose.msra.mxu0 0.0
    %552 = vmatpush.xpose.msra.mxu0 0.0
    %553 = vmatpush.xpose.msra.mxu0 0.0
    %554 = vmatpush.xpose.msra.mxu0 0.0
    %555 = vmatpush.xpose.msra.mxu0 0.0
    %556 = vmatpush.xpose.msra.mxu0 0.0
    %557 = vmatpush.xpose.msra.mxu0 0.0
    %558 = vmatpush.xpose.msra.mxu0 0.0
    %559 = vmatpush.xpose.msra.mxu0 0.0
    %560 = vmatpush.xpose.msra.mxu0 0.0
    %561 = vmatpush.xpose.msra.mxu0 0.0
    %562 = vmatpush.xpose.msra.mxu0 %v545
    %563 = vmatmul.f32.gmra.mxu0 %v543
    %v564 = vpop.f32.mrf.mxu0
    %v565 = vadd.f32 0.0, %v564
    %566 = vdwg.mxu0
    %v567 = vsel %vm125, %v537, -inf
    %568 = vmax.xlane.f32.xlu0 %v567
    %v569 = vpop.xlane.xlu0 %568
    %v570 = vsel %vm125, %v565, -inf
    %571 = vmax.xlane.f32.xlu0 %v570
    %v572 = vpop.xlane.xlu0 %571
    %v573 = vsub.f32 %v537, %v569
    %v574 = vsub.f32 %v565, %v572
    %v575 = vmul.f32 %v573, 1.442695
    %v576 = vpow.pop %v575
    %v577 = vmul.f32 %v574, 1.442695
    %v578 = vpow.pop %v577
    %v579 = vsel %vm125, %v576, 0.0
    %580 = vadd.xlane.f32.xlu0 %v579
    %v581 = vpop.xlane.xlu0 %580
    %v582 = vsel %vm125, %v578, 0.0
    %583 = vadd.xlane.f32.xlu0 %v582
    %v584 = vpop.xlane.xlu0 %583
    %v585 = vrcp.pop %v581
    %v586 = vrcp.pop %v584
    %v587 = vmul.f32 %v576, %v585
    %v588 = vmul.f32 %v578, %v586
    %589 = vrot.lane.b32.xlu0 %v117, 40
    %v590 = vpop.permute.xlu0 %589
    %v593 = vsel %vm125, %v587, 0
    %595 = vmatpush.msra.mxu0 0.0
    %596 = vmatpush.msra.mxu0 0.0
    %597 = vmatpush.msra.mxu0 0.0
    %598 = vmatpush.msra.mxu0 0.0
    %599 = vmatpush.msra.mxu0 0.0
    %600 = vmatpush.msra.mxu0 0.0
    %601 = vmatpush.msra.mxu0 0.0
    %602 = vmatpush.msra.mxu0 0.0
    %603 = vmatpush.msra.mxu0 0.0
    %604 = vmatpush.msra.mxu0 0.0
    %605 = vmatpush.msra.mxu0 0.0
    %606 = vmatpush.msra.mxu0 0.0
    %607 = vmatpush.msra.mxu0 0.0
    %608 = vmatpush.msra.mxu0 0.0
    %609 = vmatpush.msra.mxu0 0.0
    %610 = vmatpush.msra.mxu0 %v590
    %611 = vmatmul.f32.gmra.mxu0 %v593
    %v612 = vpop.f32.mrf.mxu0
    %v613 = vadd.f32 0.0, %v612
    %614 = vdwg.mxu0
    %615 = vrot.lane.b32.xlu0 %v120, 40
    %v616 = vpop.permute.xlu0 %615
    %v619 = vsel %vm125, %v588, 0
    %621 = vmatpush.msra.mxu0 0.0
    %622 = vmatpush.msra.mxu0 0.0
    %623 = vmatpush.msra.mxu0 0.0
    %624 = vmatpush.msra.mxu0 0.0
    %625 = vmatpush.msra.mxu0 0.0
    %626 = vmatpush.msra.mxu0 0.0
    %627 = vmatpush.msra.mxu0 0.0
    %628 = vmatpush.msra.mxu0 0.0
    %629 = vmatpush.msra.mxu0 0.0
    %630 = vmatpush.msra.mxu0 0.0
    %631 = vmatpush.msra.mxu0 0.0
    %632 = vmatpush.msra.mxu0 0.0
    %633 = vmatpush.msra.mxu0 0.0
    %634 = vmatpush.msra.mxu0 0.0
    %635 = vmatpush.msra.mxu0 0.0
    %636 = vmatpush.msra.mxu0 %v616
    %637 = vmatmul.f32.gmra.mxu0 %v619
    %v638 = vpop.f32.mrf.mxu0
    %v639 = vadd.f32 0.0, %v638
    %640 = vdwg.mxu0
    %643 = vrot.lane.b32.xlu0 %v353, 8
    %v644 = vpop.permute.xlu0 %643
    %645 = vrot.lane.b32.xlu0 %v379, 8
    %v646 = vpop.permute.xlu0 %645
    %651 = vrot.lane.b32.xlu0 %v483, 16
    %v652 = vpop.permute.xlu0 %651
    %653 = vrot.lane.b32.xlu0 %v509, 16
    %v654 = vpop.permute.xlu0 %653
    %659 = vrot.lane.b32.xlu0 %v613, 24
    %v660 = vpop.permute.xlu0 %659
    %661 = vrot.lane.b32.xlu0 %v639, 24
    %v662 = vpop.permute.xlu0 %661
    %v665 = vsel %vm125, %v223, %v644
    %v666 = vsel %vm125, %v249, %v646
    %vm667 = vcmask 130048
    %v668 = vsel %vm667, %v665, %v652
    %v669 = vsel %vm667, %v666, %v654
    %vm670 = vcmask 195584
    %v671 = vsel %vm670, %v668, %v660
    %v672 = vsel %vm670, %v669, %v662
    %v673 = vld [vmem:[#allocation7] sm:$0xff]
    %v674 = vld [vmem:[#allocation7 + $0x8] sm:$0xff]
    %v675 = vld [vmem:[#allocation7 + $0x10] sm:$0xff]
    %v676 = vld [vmem:[#allocation7 + $0x18] sm:$0xff]
    %v677 = vld [vmem:[#allocation8] sm:$0x1]
    %v679 = vperm.slane %v677, 0
    %v682 = vsel %vm92, %v671, 0
    %v685 = vsel %vm92, %v672, 0
    %687 = vmatpush.msra.mxu0 0.0
    %688 = vmatpush.msra.mxu0 0.0
    %689 = vmatpush.msra.mxu0 0.0
    %690 = vmatpush.msra.mxu0 0.0
    %691 = vmatpush.msra.mxu0 0.0
    %692 = vmatpush.msra.mxu0 0.0
    %693 = vmatpush.msra.mxu0 0.0
    %694 = vmatpush.msra.mxu0 0.0
    %695 = vmatpush.msra.mxu0 0.0
    %696 = vmatpush.msra.mxu0 0.0
    %697 = vmatpush.msra.mxu0 0.0
    %698 = vmatpush.msra.mxu0 0.0
    %699 = vmatpush.msra.mxu0 %v676
    %700 = vmatpush.msra.mxu0 %v675
    %701 = vmatpush.msra.mxu0 %v674
    %702 = vmatpush.msra.mxu0 %v673
    %703 = vmatmul.f32.gmra.mxu0 %v682
    %v704 = vpop.f32.mrf.mxu0
    %v705 = vadd.f32 %v679, %v704
    %706 = vmatmul.f32.gmra.mxu0 %v685
    %v707 = vpop.f32.mrf.mxu0
    %v708 = vadd.f32 %v679, %v707
    %709 = vdwg.mxu0
    %710 = vst.msk [vmem:[#allocation10] sm:$0xff] %vm92, %v705
    %711 = vst.msk [vmem:[#allocation10 + $0x8] sm:$0xff] %vm92, %v708
    // Predicated region
    $region38: #{_self_attention_forward.1} parent=1 // pred_check
      _
    $region39: #{_self_attention_forward.1} parent=1 // pred_check_branch
      %713 = sbr.rel (0) target = $region41
    $region40: #{_self_attention_forward.1} parent=1 // pred_region
      %715 = vsyncadd [#allocation4], 0
      %s716 = sshll.u32 [#allocation10], 4
      %s717 = int_to_ptr.vmem [resolvable:$true] %s716
      %s718 = sshll.u32 %s5, 4
      %s719 = int_to_ptr.hbm [resolvable:$true] %s718
      %724 = dma.vmem_to_hbm [thread:$0]  %s717, 256, %s719, [#allocation4], 128, 128, 8
    $region41: #{_self_attention_forward.1} parent=1 // pred_fallthru
      _
    // Predicated region
    $region42: #{_self_attention_forward.1} parent=1 // pred_check
      _
    $region43: #{_self_attention_forward.1} parent=1 // pred_check_branch
      %726 = sbr.rel (0) target = $region45
    $region44: #{_self_attention_forward.1} parent=1 // pred_region
      %728 = dma.done [#allocation4], 256
    $region45: #{_self_attention_forward.1} parent=1 // pred_fallthru
      _
    %729 = vsyncpa [#allocation3], 1
    %730 = vsyncpa [#allocation6], 1
    %731 = vsyncpa [#allocation9], 1
    %732 = vsyncpa [#allocation4], 1

</llo_original>
